<compile_context>
chip_gen: v5e
topology: v5e:2x2
jax: 0.10.0
libtpu: 0.0.40
codegen_flags: <defaults>
</compile_context>

<pallas_src>
import functools

import jax
import jax.numpy as jnp
from jax.experimental import pallas as pl
from jax.experimental.pallas import tpu as pltpu


def _critic_kernel(xt_ref, p_ref, out_ref, *, vpu_hidden: bool):
    # xt_ref : (S, TM)      state tile, transposed (batch on the lane axis)
    # p_ref  : (H1, S+2)    packed params: cols [0:S] = W1ᵀ (with folded-b2 row),
    #                       col S = b1, col S+1 = w2
    # out_ref: (1, TM)      lane-dense value output
    S = xt_ref.shape[0]
    w1t = p_ref[:, 0:S]            # (H1, S)  static slice
    b1 = p_ref[:, S:S + 1]         # (H1, 1)
    w2 = p_ref[:, S + 1:S + 2]     # (H1, 1)

    xt = xt_ref[...]               # (S, TM)

    if vpu_hidden:
        # Small-batch latency path: S broadcast multiply-adds on the VPU
        # (MXU fill/drain latency exceeds the math at K=6 when the grid is 1 step).
        h = b1
        for s in range(S):         # short static unroll (S ~ 6)
            h = h + w1t[:, s:s + 1] * xt[s:s + 1, :]        # (H1,1)*(1,TM) -> (H1,TM)
    else:
        # Throughput path: MXU matmul with N = TM lanes (lane-dense).
        h = jnp.dot(w1t, xt, preferred_element_type=jnp.float32) + b1   # (H1, TM)

    h = jnp.maximum(h, 0.0)

    # Output layer: VPU multiply + sublane reduction over the ~33 hidden rows.
    # Result comes out directly as (1, TM): no relayout, unmasked lane-dense store.
    out_ref[...] = jnp.sum(h * w2, axis=0, keepdims=True).astype(out_ref.dtype)


def _round_up(x, m):
    return (x + m - 1) // m * m


def critic_value_t(state_t, packed_params, *, tm=8192):
    """Core entry point. state_t: (S, B) f32 (batch on the lane axis). Returns (1, B)."""
    S, B = state_t.shape
    H1 = packed_params.shape[0]
    tm = max(128, _round_up(int(tm), 128))

    if B <= 256:
        # Single full-array block: pure latency path.
        TM = B
    else:
        # >= 2 grid steps so "parallel" actually shards the batch across both
        # TensorCores on v7x; cap at `tm` (sweep 2048-8192+) to keep the step
        # count low for very large B.
        TM = min(tm, _round_up(pl.cdiv(B, 2), 128))
    grid = (pl.cdiv(B, TM),)

    kernel = functools.partial(_critic_kernel, vpu_hidden=(TM <= 64))

    out = pl.pallas_call(
        kernel,
        out_shape=jax.ShapeDtypeStruct((1, B), jnp.float32),   # keep exactly (1, B) so
        grid=grid,                                              # partial blocks are masked
        in_specs=[
            pl.BlockSpec((S, TM), lambda i: (0, i)),            # lane-dense state tile
            pl.BlockSpec((H1, S + 2), lambda i: (0, 0)),        # packed weights, resident
        ],
        out_specs=pl.BlockSpec((1, TM), lambda i: (0, i)),      # lane-dense (1, TM) store
        compiler_params=pltpu.CompilerParams(
            dimension_semantics=("parallel",),                  # shard batch across cores
        ),
    )(state_t, packed_params)
    return out                                                  # (1, B)


def critic_forward(state, packed_params, *, tm=8192):
    """state: (B, S) f32 (PyTorch layout). Returns (B, 1) f32.

    The kernel wants (S, B); a wrapper transpose costs one extra HBM pass over the
    input, so for throughput-scale batches produce the state transposed upstream
    and call critic_value_t directly.
    """
    B = state.shape[0]
    out = critic_value_t(state.T, packed_params, tm=tm)         # (1, B)
    return out.reshape(B, 1)                                    # element-order-preserving


def init_critic_params(key, state_dim, hidden_nodes=32):
    """Deterministic init mimicking PyTorch nn.Linear default (U[-1/sqrt(in), 1/sqrt(in)])."""
    k1, k2, k3, k4 = jax.random.split(key, 4)
    bound1 = 1.0 / jnp.sqrt(jnp.float32(state_dim))
    bound2 = 1.0 / jnp.sqrt(jnp.float32(hidden_nodes))
    # Stored as (in, out) — the transpose of PyTorch's (out, in) weight layout.
    w1 = jax.random.uniform(k1, (state_dim, hidden_nodes), jnp.float32, -bound1, bound1)
    b1 = jax.random.uniform(k2, (hidden_nodes,), jnp.float32, -bound1, bound1)
    w2 = jax.random.uniform(k3, (hidden_nodes,), jnp.float32, -bound2, bound2)
    b2 = jax.random.uniform(k4, (), jnp.float32, -bound2, bound2)
    return w1, b1, w2, b2


def pack_critic_params(w1, b1, w2, b2):
    """Pack (W1, b1, w2, b2) into ONE (H+1, S+2) f32 slab (single DMA / VMEM tile).

    Layout (transposed formulation):
      rows 0..H-1 : [ W1ᵀ (H,S) | b1 (H,1) | w2 (H,1) ]
      row  H      : [ 0 ...  0  |    1     |    b2    ]  <- b2 folded in as one extra
                                                           hidden unit (relu(1) == 1)
    """
    S, H = w1.shape
    top = jnp.concatenate(
        [w1.T, b1.reshape(H, 1), w2.reshape(H, 1)], axis=1
    ).astype(jnp.float32)                                        # (H, S+2)
    bot = jnp.concatenate(
        [jnp.zeros((1, S), jnp.float32),
         jnp.ones((1, 1), jnp.float32),
         jnp.reshape(b2, (1, 1)).astype(jnp.float32)], axis=1
    )                                                            # (1, S+2)
    return jnp.concatenate([top, bot], axis=0)                   # (H+1, S+2)


if __name__ == "__main__":
    key = jax.random.PRNGKey(0)
    k_params, k_state = jax.random.split(key)

    batch = 8
    state_dim = 6        # Acrobot-v1 observation dimension
    hidden_nodes = 32

    w1, b1, w2, b2 = init_critic_params(k_params, state_dim, hidden_nodes)
    packed = pack_critic_params(w1, b1, w2, b2)
    state = jax.random.normal(k_state, (batch, state_dim), jnp.float32)

    value = critic_forward(state, packed)
    value = jax.block_until_ready(value)

    # Reference check in plain JAX (same math as the PyTorch module).
    ref = jnp.maximum(state @ w1 + b1[None, :], 0.0) @ w2.reshape(-1, 1) + b2
    assert value.shape == (batch, 1)
    assert jnp.allclose(value, ref, atol=1e-5, rtol=1e-5)

    print("KERNEL_OK")
</pallas_src>

<mosaic_0001>
module attributes {stable_mosaic.version = 11 : i64} {
  func.func @_critic_kernel(%arg0: i32, %arg1: memref<6x8xf32, #tpu.memory_space<vmem>>, %arg2: memref<33x8xf32, #tpu.memory_space<vmem>>, %arg3: memref<1x8xf32, #tpu.memory_space<vmem>>) attributes {dimension_semantics = [#tpu.dimension_semantics<parallel>], iteration_bounds = array<i64: 1>, scalar_prefetch = 0 : i64, scratch_operands = 0 : i64, tpu.core_type = #tpu.core_type<tc>, window_params = [{transform_indices = @transform_0, window_bounds = array<i64: 6, 8>}, {pipeline_mode = #tpu.pipeline_mode<synchronous>, transform_indices = @transform_1, window_bounds = array<i64: 33, 8>}, {transform_indices = @transform_2, window_bounds = array<i64: 1, 8>}]} {
    %c0 = arith.constant 0 : index
    %c0_0 = arith.constant 0 : index
    %0 = vector.load %arg2[%c0, %c0_0] : memref<33x8xf32, #tpu.memory_space<vmem>>, vector<33x6xf32>
    %c0_1 = arith.constant 0 : index
    %c6 = arith.constant 6 : index
    %1 = vector.load %arg2[%c0_1, %c6] : memref<33x8xf32, #tpu.memory_space<vmem>>, vector<33x1xf32>
    %c0_2 = arith.constant 0 : index
    %c7 = arith.constant 7 : index
    %2 = vector.load %arg2[%c0_2, %c7] : memref<33x8xf32, #tpu.memory_space<vmem>>, vector<33x1xf32>
    %c0_3 = arith.constant 0 : index
    %c0_4 = arith.constant 0 : index
    %3 = vector.load %arg1[%c0_3, %c0_4] : memref<6x8xf32, #tpu.memory_space<vmem>>, vector<6x8xf32>
    %4 = vector.extract_strided_slice %0 {offsets = [0, 0], sizes = [33, 1], strides = [1, 1]} : vector<33x6xf32> to vector<33x1xf32>
    %5 = vector.extract_strided_slice %3 {offsets = [0, 0], sizes = [1, 8], strides = [1, 1]} : vector<6x8xf32> to vector<1x8xf32>
    %6 = vector.broadcast %4 : vector<33x1xf32> to vector<33x8xf32>
    %7 = vector.broadcast %5 : vector<1x8xf32> to vector<33x8xf32>
    %8 = arith.mulf %6, %7 : vector<33x8xf32>
    %9 = vector.broadcast %1 : vector<33x1xf32> to vector<33x8xf32>
    %10 = arith.addf %9, %8 : vector<33x8xf32>
    %11 = vector.extract_strided_slice %0 {offsets = [0, 1], sizes = [33, 1], strides = [1, 1]} : vector<33x6xf32> to vector<33x1xf32>
    %12 = vector.extract_strided_slice %3 {offsets = [1, 0], sizes = [1, 8], strides = [1, 1]} : vector<6x8xf32> to vector<1x8xf32>
    %13 = vector.broadcast %11 : vector<33x1xf32> to vector<33x8xf32>
    %14 = vector.broadcast %12 : vector<1x8xf32> to vector<33x8xf32>
    %15 = arith.mulf %13, %14 : vector<33x8xf32>
    %16 = arith.addf %10, %15 : vector<33x8xf32>
    %17 = vector.extract_strided_slice %0 {offsets = [0, 2], sizes = [33, 1], strides = [1, 1]} : vector<33x6xf32> to vector<33x1xf32>
    %18 = vector.extract_strided_slice %3 {offsets = [2, 0], sizes = [1, 8], strides = [1, 1]} : vector<6x8xf32> to vector<1x8xf32>
    %19 = vector.broadcast %17 : vector<33x1xf32> to vector<33x8xf32>
    %20 = vector.broadcast %18 : vector<1x8xf32> to vector<33x8xf32>
    %21 = arith.mulf %19, %20 : vector<33x8xf32>
    %22 = arith.addf %16, %21 : vector<33x8xf32>
    %23 = vector.extract_strided_slice %0 {offsets = [0, 3], sizes = [33, 1], strides = [1, 1]} : vector<33x6xf32> to vector<33x1xf32>
    %24 = vector.extract_strided_slice %3 {offsets = [3, 0], sizes = [1, 8], strides = [1, 1]} : vector<6x8xf32> to vector<1x8xf32>
    %25 = vector.broadcast %23 : vector<33x1xf32> to vector<33x8xf32>
    %26 = vector.broadcast %24 : vector<1x8xf32> to vector<33x8xf32>
    %27 = arith.mulf %25, %26 : vector<33x8xf32>
    %28 = arith.addf %22, %27 : vector<33x8xf32>
    %29 = vector.extract_strided_slice %0 {offsets = [0, 4], sizes = [33, 1], strides = [1, 1]} : vector<33x6xf32> to vector<33x1xf32>
    %30 = vector.extract_strided_slice %3 {offsets = [4, 0], sizes = [1, 8], strides = [1, 1]} : vector<6x8xf32> to vector<1x8xf32>
    %31 = vector.broadcast %29 : vector<33x1xf32> to vector<33x8xf32>
    %32 = vector.broadcast %30 : vector<1x8xf32> to vector<33x8xf32>
    %33 = arith.mulf %31, %32 : vector<33x8xf32>
    %34 = arith.addf %28, %33 : vector<33x8xf32>
    %35 = vector.extract_strided_slice %0 {offsets = [0, 5], sizes = [33, 1], strides = [1, 1]} : vector<33x6xf32> to vector<33x1xf32>
    %36 = vector.extract_strided_slice %3 {offsets = [5, 0], sizes = [1, 8], strides = [1, 1]} : vector<6x8xf32> to vector<1x8xf32>
    %37 = vector.broadcast %35 : vector<33x1xf32> to vector<33x8xf32>
    %38 = vector.broadcast %36 : vector<1x8xf32> to vector<33x8xf32>
    %39 = arith.mulf %37, %38 : vector<33x8xf32>
    %40 = arith.addf %34, %39 : vector<33x8xf32>
    %cst = arith.constant 0.000000e+00 : f32
    %41 = vector.broadcast %cst : f32 to vector<33x8xf32>
    %42 = arith.maximumf %40, %41 : vector<33x8xf32>
    %43 = vector.broadcast %2 : vector<33x1xf32> to vector<33x8xf32>
    %44 = arith.mulf %42, %43 : vector<33x8xf32>
    %cst_5 = arith.constant dense<0.000000e+00> : vector<8xf32>
    %45 = vector.multi_reduction <add>, %44, %cst_5 [0] : vector<33x8xf32> to vector<8xf32>
    %46 = vector.shape_cast %45 : vector<8xf32> to vector<1x8xf32>
    %c0_6 = arith.constant 0 : index
    %c0_7 = arith.constant 0 : index
    %47 = vector.load %arg3[%c0_6, %c0_7] : memref<1x8xf32, #tpu.memory_space<vmem>>, vector<1x8xf32>
    tpu.vector_store %arg3[%c0_6, %c0_7], %46 {strides = array<i32>} : memref<1x8xf32, #tpu.memory_space<vmem>>, vector<1x8xf32>,
    return
  }
  func.func @transform_0(%arg0: i32) -> (i32, i32) {
    %c0_i32 = arith.constant 0 : i32
    %c0_i32_0 = arith.constant 0 : i32
    return %c0_i32, %arg0 : i32, i32
  }
  func.func @transform_1(%arg0: i32) -> (i32, i32) {
    %c0_i32 = arith.constant 0 : i32
    %c0_i32_0 = arith.constant 0 : i32
    %c0_i32_1 = arith.constant 0 : i32
    return %c0_i32, %c0_i32_0 : i32, i32
  }
  func.func @transform_2(%arg0: i32) -> (i32, i32) {
    %c0_i32 = arith.constant 0 : i32
    %c0_i32_0 = arith.constant 0 : i32
    return %c0_i32, %arg0 : i32, i32
  }
}

</mosaic_0001>

<llo_original>
// kernel: tpu_custom_call.1
$region0: #{tpu_custom_call.1}
  #allocation0 [shape = 'u32[]', space=smem, size = 0x4, offset = 0x4, fixed_abs, tag = 'smem constant byte address 0x4 - core index']
  #allocation1 [shape = 'u32[72,128]{1,0:T(1,128)}', space=vmem, size = 0x9000, scoped, tag = 'internal scratch']
  %s0 = inlined_call_operand.vmem [shape: f32[6,8], index: 0, kind: input, shape index: {}]
  %s1 = inlined_call_operand.vmem [shape: f32[33,8], index: 1, kind: input, shape index: {}]
  %s2 = inlined_call_operand.hbm [shape: f32[1,8], index: 2, kind: output, shape index: {}]
  %s3 = sld [smem:[#allocation0]]
  $region18: #{tpu_custom_call.1} parent=0
    _
  %s5 = ssub.s32 1, %s3
  %s6 = scalar_select 0, %s5, %s3
  $region1: #{tpu_custom_call.1} parent=0
    #allocation2 [shape = 'u8[512]{0}', space=vmem, size = 0x400, scoped, tag = 'output window, operand 0, single buffered']
    #allocation3 [shape = 's32[1]{0}', space=sflag, size = 0x4, scoped, tag = 'scoped memory for tpu_custom_call.1']
    %7 = vsyncpa [#allocation3], 0
    // Predicated region
    $region2: #{tpu_custom_call.1} parent=1 // pred_check
      _
    $region3: #{tpu_custom_call.1} parent=1 // pred_check_branch
      %9 = sbr.rel (0) target = $region5
    $region4: #{tpu_custom_call.1} parent=1 // pred_region
      _
    $region5: #{tpu_custom_call.1} parent=1 // pred_fallthru
      _
    // Predicated region
    $region6: #{tpu_custom_call.1} parent=1 // pred_check
      _
    $region7: #{tpu_custom_call.1} parent=1 // pred_check_branch
      %11 = sbr.rel (0) target = $region9
    $region8: #{tpu_custom_call.1} parent=1 // pred_region
      _
    $region9: #{tpu_custom_call.1} parent=1 // pred_fallthru
      _
    %v12 = vld [vmem:[%s1] sm:$0xff]
    %v13 = vld [vmem:[%s1 + $0x8] sm:$0xff]
    %v14 = vld [vmem:[%s1 + $0x10] sm:$0xff]
    %v15 = vld [vmem:[%s1 + $0x18] sm:$0xff]
    %v16 = vld [vmem:[%s1 + $0x20] sm:$0x1]
    %v17 = vld [vmem:[%s0] sm:$0x3f]
    %19 = vset.pattern.permute.xlu0 0
    %20 = vperm.xlu0 %19, %v12
    %v21 = vpop.permute.xlu0 %20
    %24 = vset.pattern.permute.xlu0 0
    %25 = vperm.xlu0 %24, %v13
    %v26 = vpop.permute.xlu0 %25
    %29 = vset.pattern.permute.xlu0 0
    %30 = vperm.xlu0 %29, %v14
    %v31 = vpop.permute.xlu0 %30
    %34 = vset.pattern.permute.xlu0 0
    %35 = vperm.xlu0 %34, %v15
    %v36 = vpop.permute.xlu0 %35
    %39 = vset.pattern.permute.xlu0 0
    %40 = vperm.xlu0 %39, %v16
    %v41 = vpop.permute.xlu0 %40
    %v43 = vperm.slane %v17, 0
    %v44 = vmul.f32 %v21, %v43
    %v45 = vmul.f32 %v26, %v43
    %v46 = vmul.f32 %v31, %v43
    %v47 = vmul.f32 %v36, %v43
    %v48 = vmul.f32 %v41, %v43
    %49 = vset.pattern.permute.xlu0 6
    %50 = vperm.xlu0 %49, %v12
    %v51 = vpop.permute.xlu0 %50
    %53 = vset.pattern.permute.xlu0 6
    %54 = vperm.xlu0 %53, %v13
    %v55 = vpop.permute.xlu0 %54
    %57 = vset.pattern.permute.xlu0 6
    %58 = vperm.xlu0 %57, %v14
    %v59 = vpop.permute.xlu0 %58
    %61 = vset.pattern.permute.xlu0 6
    %62 = vperm.xlu0 %61, %v15
    %v63 = vpop.permute.xlu0 %62
    %65 = vset.pattern.permute.xlu0 6
    %66 = vperm.xlu0 %65, %v16
    %v67 = vpop.permute.xlu0 %66
    %v69 = vadd.f32 %v51, %v44
    %v70 = vadd.f32 %v55, %v45
    %v71 = vadd.f32 %v59, %v46
    %v72 = vadd.f32 %v63, %v47
    %v73 = vadd.f32 %v67, %v48
    %74 = vset.pattern.permute.xlu0 1
    %75 = vperm.xlu0 %74, %v12
    %v76 = vpop.permute.xlu0 %75
    %78 = vset.pattern.permute.xlu0 1
    %79 = vperm.xlu0 %78, %v13
    %v80 = vpop.permute.xlu0 %79
    %82 = vset.pattern.permute.xlu0 1
    %83 = vperm.xlu0 %82, %v14
    %v84 = vpop.permute.xlu0 %83
    %86 = vset.pattern.permute.xlu0 1
    %87 = vperm.xlu0 %86, %v15
    %v88 = vpop.permute.xlu0 %87
    %90 = vset.pattern.permute.xlu0 1
    %91 = vperm.xlu0 %90, %v16
    %v92 = vpop.permute.xlu0 %91
    %v94 = vperm.slane %v17, 1
    %v95 = vmul.f32 %v76, %v94
    %v96 = vmul.f32 %v80, %v94
    %v97 = vmul.f32 %v84, %v94
    %v98 = vmul.f32 %v88, %v94
    %v99 = vmul.f32 %v92, %v94
    %v100 = vadd.f32 %v69, %v95
    %v101 = vadd.f32 %v70, %v96
    %v102 = vadd.f32 %v71, %v97
    %v103 = vadd.f32 %v72, %v98
    %v104 = vadd.f32 %v73, %v99
    %105 = vset.pattern.permute.xlu0 2
    %106 = vperm.xlu0 %105, %v12
    %v107 = vpop.permute.xlu0 %106
    %109 = vset.pattern.permute.xlu0 2
    %110 = vperm.xlu0 %109, %v13
    %v111 = vpop.permute.xlu0 %110
    %113 = vset.pattern.permute.xlu0 2
    %114 = vperm.xlu0 %113, %v14
    %v115 = vpop.permute.xlu0 %114
    %117 = vset.pattern.permute.xlu0 2
    %118 = vperm.xlu0 %117, %v15
    %v119 = vpop.permute.xlu0 %118
    %121 = vset.pattern.permute.xlu0 2
    %122 = vperm.xlu0 %121, %v16
    %v123 = vpop.permute.xlu0 %122
    %v125 = vperm.slane %v17, 2
    %v126 = vmul.f32 %v107, %v125
    %v127 = vmul.f32 %v111, %v125
    %v128 = vmul.f32 %v115, %v125
    %v129 = vmul.f32 %v119, %v125
    %v130 = vmul.f32 %v123, %v125
    %v131 = vadd.f32 %v100, %v126
    %v132 = vadd.f32 %v101, %v127
    %v133 = vadd.f32 %v102, %v128
    %v134 = vadd.f32 %v103, %v129
    %v135 = vadd.f32 %v104, %v130
    %136 = vset.pattern.permute.xlu0 3
    %137 = vperm.xlu0 %136, %v12
    %v138 = vpop.permute.xlu0 %137
    %140 = vset.pattern.permute.xlu0 3
    %141 = vperm.xlu0 %140, %v13
    %v142 = vpop.permute.xlu0 %141
    %144 = vset.pattern.permute.xlu0 3
    %145 = vperm.xlu0 %144, %v14
    %v146 = vpop.permute.xlu0 %145
    %148 = vset.pattern.permute.xlu0 3
    %149 = vperm.xlu0 %148, %v15
    %v150 = vpop.permute.xlu0 %149
    %152 = vset.pattern.permute.xlu0 3
    %153 = vperm.xlu0 %152, %v16
    %v154 = vpop.permute.xlu0 %153
    %v156 = vperm.slane %v17, 3
    %v157 = vmul.f32 %v138, %v156
    %v158 = vmul.f32 %v142, %v156
    %v159 = vmul.f32 %v146, %v156
    %v160 = vmul.f32 %v150, %v156
    %v161 = vmul.f32 %v154, %v156
    %v162 = vadd.f32 %v131, %v157
    %v163 = vadd.f32 %v132, %v158
    %v164 = vadd.f32 %v133, %v159
    %v165 = vadd.f32 %v134, %v160
    %v166 = vadd.f32 %v135, %v161
    %167 = vset.pattern.permute.xlu0 4
    %168 = vperm.xlu0 %167, %v12
    %v169 = vpop.permute.xlu0 %168
    %171 = vset.pattern.permute.xlu0 4
    %172 = vperm.xlu0 %171, %v13
    %v173 = vpop.permute.xlu0 %172
    %175 = vset.pattern.permute.xlu0 4
    %176 = vperm.xlu0 %175, %v14
    %v177 = vpop.permute.xlu0 %176
    %179 = vset.pattern.permute.xlu0 4
    %180 = vperm.xlu0 %179, %v15
    %v181 = vpop.permute.xlu0 %180
    %183 = vset.pattern.permute.xlu0 4
    %184 = vperm.xlu0 %183, %v16
    %v185 = vpop.permute.xlu0 %184
    %v187 = vperm.slane %v17, 4
    %v188 = vmul.f32 %v169, %v187
    %v189 = vmul.f32 %v173, %v187
    %v190 = vmul.f32 %v177, %v187
    %v191 = vmul.f32 %v181, %v187
    %v192 = vmul.f32 %v185, %v187
    %v193 = vadd.f32 %v162, %v188
    %v194 = vadd.f32 %v163, %v189
    %v195 = vadd.f32 %v164, %v190
    %v196 = vadd.f32 %v165, %v191
    %v197 = vadd.f32 %v166, %v192
    %198 = vset.pattern.permute.xlu0 5
    %199 = vperm.xlu0 %198, %v12
    %v200 = vpop.permute.xlu0 %199
    %202 = vset.pattern.permute.xlu0 5
    %203 = vperm.xlu0 %202, %v13
    %v204 = vpop.permute.xlu0 %203
    %206 = vset.pattern.permute.xlu0 5
    %207 = vperm.xlu0 %206, %v14
    %v208 = vpop.permute.xlu0 %207
    %210 = vset.pattern.permute.xlu0 5
    %211 = vperm.xlu0 %210, %v15
    %v212 = vpop.permute.xlu0 %211
    %214 = vset.pattern.permute.xlu0 5
    %215 = vperm.xlu0 %214, %v16
    %v216 = vpop.permute.xlu0 %215
    %v218 = vperm.slane %v17, 5
    %v219 = vmul.f32 %v200, %v218
    %v220 = vmul.f32 %v204, %v218
    %v221 = vmul.f32 %v208, %v218
    %v222 = vmul.f32 %v212, %v218
    %v223 = vmul.f32 %v216, %v218
    %v224 = vadd.f32 %v193, %v219
    %v225 = vadd.f32 %v194, %v220
    %v226 = vadd.f32 %v195, %v221
    %v227 = vadd.f32 %v196, %v222
    %v228 = vadd.f32 %v197, %v223
    %v229 = vmax.f32 %v224, 0.0
    %v230 = vmax.f32 %v225, 0.0
    %v231 = vmax.f32 %v226, 0.0
    %v232 = vmax.f32 %v227, 0.0
    %v233 = vmax.f32 %v228, 0.0
    %234 = vset.pattern.permute.xlu0 7
    %235 = vperm.xlu0 %234, %v12
    %v236 = vpop.permute.xlu0 %235
    %238 = vset.pattern.permute.xlu0 7
    %239 = vperm.xlu0 %238, %v13
    %v240 = vpop.permute.xlu0 %239
    %242 = vset.pattern.permute.xlu0 7
    %243 = vperm.xlu0 %242, %v14
    %v244 = vpop.permute.xlu0 %243
    %246 = vset.pattern.permute.xlu0 7
    %247 = vperm.xlu0 %246, %v15
    %v248 = vpop.permute.xlu0 %247
    %250 = vset.pattern.permute.xlu0 7
    %251 = vperm.xlu0 %250, %v16
    %v252 = vpop.permute.xlu0 %251
    %v254 = vmul.f32 %v229, %v236
    %v255 = vmul.f32 %v230, %v240
    %v256 = vmul.f32 %v231, %v244
    %v257 = vmul.f32 %v232, %v248
    %v258 = vmul.f32 %v233, %v252
    %vm259 = vcmask 64512
    %v260 = vsel %vm259, %v254, 0.0
    %v261 = vsel %vm259, %v255, 0.0
    %v262 = vadd.f32 %v260, %v261
    %v263 = vsel %vm259, %v256, 0.0
    %v264 = vadd.f32 %v262, %v263
    %v265 = vsel %vm259, %v257, 0.0
    %v266 = vadd.f32 %v264, %v265
    %vm267 = vcmask 57344
    %v268 = vsel %vm267, %v258, 0.0
    %v269 = vadd.f32 %v266, %v268
    %v270 = vrot.slane %v269, 4
    %v271 = vadd.f32 %v269, %v270
    %v272 = vrot.slane %v271, 2
    %v273 = vadd.f32 %v271, %v272
    %v274 = vrot.slane %v273, 1
    %v275 = vadd.f32 %v273, %v274
    %276 = vst.msk [vmem:[#allocation2] sm:$0x1] %vm267, %v275
    // Predicated region
    $region10: #{tpu_custom_call.1} parent=1 // pred_check
      _
    $region11: #{tpu_custom_call.1} parent=1 // pred_check_branch
      %278 = sbr.rel (0) target = $region13
    $region12: #{tpu_custom_call.1} parent=1 // pred_region
      %280 = vsyncadd [#allocation3], 0
      %s282 = sshll.u32 [#allocation2], 4
      %s283 = int_to_ptr.vmem [resolvable:$true] %s282
      %s284 = sshll.u32 %s2, 4
      %s285 = int_to_ptr.hbm [resolvable:$true] %s284
      %287 = dma.vmem_to_hbm [thread:$0]  %s283, 16, %s285, [#allocation3]
    $region13: #{tpu_custom_call.1} parent=1 // pred_fallthru
      _
    // Predicated region
    $region14: #{tpu_custom_call.1} parent=1 // pred_check
      _
    $region15: #{tpu_custom_call.1} parent=1 // pred_check_branch
      %289 = sbr.rel (0) target = $region17
    $region16: #{tpu_custom_call.1} parent=1 // pred_region
      %291 = dma.done [#allocation3], 16
    $region17: #{tpu_custom_call.1} parent=1 // pred_fallthru
      _
    %292 = vsyncpa [#allocation3], 1

</llo_original>
